<compile_context>
chip_gen: v7x
topology: tpu7x:2x2x1
jax: 0.10.0
libtpu: 0.0.40
codegen_flags: <defaults>
</compile_context>

<pallas_src>
import functools

import jax
import jax.numpy as jnp
from jax.experimental import pallas as pl
from jax.experimental.pallas import tpu as pltpu


def _round_up(x: int, m: int) -> int:
    return (x + m - 1) // m * m


def _kan_kernel(x_ref, coeffs_ref, wT_ref, b_ref, o_ref, proj_ref, *, degree: int):
    # x_ref:      (TM, Dp)        tile of input rows (padded D)
    # coeffs_ref: (degree+1, Dp)  basis coefficients, f32 (transposed, D on lanes)
    # wT_ref:     (Dp, TN)        column tile of W^T (already in MXU dtype)
    # b_ref:      (1, TN)         bias tile, f32
    # o_ref:      (TM, TN)        output tile
    # proj_ref:   (TM, Dp)        VMEM scratch holding the basis projection
    #                             (computed once per row tile, reused over j)

    @pl.when(pl.program_id(1) == 0)
    def _():
        x = x_ref[...].astype(jnp.float32)
        c = coeffs_ref[...]                         # single load of all coeffs
        # Horner:  p = ((c_deg * x + c_{deg-1}) * x + ... ) * x + c_0
        acc = jnp.broadcast_to(c[degree:degree + 1, :], x.shape)
        for d in range(degree - 1, -1, -1):
            acc = acc * x + c[d:d + 1, :]
        proj_ref[...] = acc.astype(proj_ref.dtype)

    out = jnp.dot(proj_ref[...], wT_ref[...], preferred_element_type=jnp.float32)
    out = out + b_ref[...]                          # (1, TN) broadcasts over rows
    o_ref[...] = out.astype(o_ref.dtype)


def kan_layer_forward(
    x,
    basis_coeffs,
    weight,
    bias,
    *,
    degree: int,
    tile_m: int = 256,
    tile_n: int = 512,
    mxu_dtype=jnp.float32,   # set to jnp.bfloat16 on v6e/v7x for full-rate MXU
):
    """x: (N, D) or (B, K, D). basis_coeffs: (D, degree+1). weight: (OUT, D). bias: (OUT,)."""
    if x.ndim == 3:
        B, K, D = x.shape
        x = x.reshape(B * K, D)
    N, D = x.shape
    OUT = weight.shape[0]
    out_dtype = x.dtype

    # Lane-dense padding (multiples of 128 on the lane axis).
    D_pad = _round_up(D, 128)
    OUT_pad = _round_up(OUT, 128)

    # Tile sizes: sublane-multiple rows, lane-multiple output columns.
    tm = min(tile_m, _round_up(N, 8))
    tn = min(tile_n, OUT_pad)
    N_pad = _round_up(N, tm)

    # Zero padding keeps results exact: padded coeff columns are 0 -> padded
    # proj columns are exactly 0; padded W^T rows/cols and bias entries are 0.
    x_p = jnp.pad(x, ((0, N_pad - N), (0, D_pad - D)))
    coeffs_t = jnp.pad(
        basis_coeffs.T.astype(jnp.float32), ((0, 0), (0, D_pad - D))
    )                                                          # (degree+1, Dp)
    wT = jnp.pad(weight.T, ((0, D_pad - D), (0, OUT_pad - OUT))).astype(mxu_dtype)
    b2 = jnp.pad(bias.astype(jnp.float32), (0, OUT_pad - OUT)).reshape(1, OUT_pad)

    grid = (N_pad // tm, OUT_pad // tn)
    kernel = functools.partial(_kan_kernel, degree=degree)

    out_p = pl.pallas_call(
        kernel,
        out_shape=jax.ShapeDtypeStruct((N_pad, OUT_pad), out_dtype),
        grid_spec=pltpu.PrefetchScalarGridSpec(
            num_scalar_prefetch=0,
            grid=grid,
            in_specs=[
                pl.BlockSpec((tm, D_pad), lambda i, j: (i, 0)),          # x rows
                pl.BlockSpec((degree + 1, D_pad), lambda i, j: (0, 0)),  # coeffs
                pl.BlockSpec((D_pad, tn), lambda i, j: (0, j)),          # W^T cols
                pl.BlockSpec((1, tn), lambda i, j: (0, j)),              # bias
            ],
            out_specs=pl.BlockSpec((tm, tn), lambda i, j: (i, j)),
            scratch_shapes=[pltpu.VMEM((tm, D_pad), mxu_dtype)],         # proj
        ),
        compiler_params=pltpu.CompilerParams(
            # Row axis parallel (megacore / 2-TC sharding); OUT axis must run
            # in order so the proj scratch computed at j==0 is reused.
            dimension_semantics=("parallel", "arbitrary"),
        ),
    )(x_p, coeffs_t, wT, b2)

    return out_p[:N, :OUT]


def kan_layer_reference(x, basis_coeffs, weight, bias, *, degree: int):
    """Pure-JAX reference mirroring the PyTorch forward exactly."""
    if x.ndim == 3:
        B, K, D = x.shape
        x = x.reshape(B * K, D)
    basis_stack = jnp.stack([x ** d for d in range(degree + 1)], axis=-1)
    projected = (basis_stack * basis_coeffs).sum(axis=-1)
    return projected @ weight.T + bias


def _make_params(key, in_features, out_features, degree):
    k_c, k_w, k_b = jax.random.split(key, 3)
    basis_coeffs = jax.random.normal(k_c, (in_features, degree + 1), dtype=jnp.float32)
    limit = 1.0 / (in_features ** 0.5)
    weight = jax.random.uniform(
        k_w, (out_features, in_features), minval=-limit, maxval=limit, dtype=jnp.float32
    )
    bias = jax.random.uniform(
        k_b, (out_features,), minval=-limit, maxval=limit, dtype=jnp.float32
    )
    return basis_coeffs, weight, bias


if __name__ == "__main__":
    key = jax.random.PRNGKey(0)
    k1, k2, k3 = jax.random.split(key, 3)

    # --- Test 1: module-sized demo (B=2, K=8, in=32, out=32, degree=3), f32 MXU.
    in_f, out_f, degree = 32, 32, 3
    B, K = 2, 8
    x = jax.random.normal(k1, (B, K, in_f), dtype=jnp.float32)
    basis_coeffs, weight, bias = _make_params(k2, in_f, out_f, degree)

    out = kan_layer_forward(x, basis_coeffs, weight, bias, degree=degree)
    out = jax.block_until_ready(out)
    ref = kan_layer_reference(x, basis_coeffs, weight, bias, degree=degree)
    assert out.shape == (B * K, out_f), out.shape
    assert jnp.allclose(out, ref, atol=1e-3, rtol=1e-3), "f32 path mismatch vs reference"

    # --- Test 2: non-aligned shapes exercising row padding + multi-tile grid
    #             (N=240 rows, D=80 -> pad 128, OUT=200 -> pad 256, 2x2 grid),
    #             with bf16 MXU operands (v6e/v7x-style) and f32 accumulation.
    in_f2, out_f2, degree2 = 80, 200, 2
    N2 = 240
    x2 = jax.random.normal(k3, (N2, in_f2), dtype=jnp.float32)
    basis_coeffs2, weight2, bias2 = _make_params(k2, in_f2, out_f2, degree2)

    out2 = kan_layer_forward(
        x2, basis_coeffs2, weight2, bias2,
        degree=degree2, tile_m=128, tile_n=128, mxu_dtype=jnp.bfloat16,
    )
    out2 = jax.block_until_ready(out2)
    ref2 = kan_layer_reference(x2, basis_coeffs2, weight2, bias2, degree=degree2)
    assert out2.shape == (N2, out_f2), out2.shape
    assert jnp.allclose(out2, ref2, atol=0.25, rtol=0.05), "bf16 path mismatch vs reference"

    print("KERNEL_OK")
</pallas_src>

<mosaic_0001>
module attributes {stable_mosaic.version = 11 : i64} {
  func.func @_kan_kernel(%arg0: i32, %arg1: i32, %arg2: memref<16x128xf32, #tpu.memory_space<vmem>>, %arg3: memref<4x128xf32, #tpu.memory_space<vmem>>, %arg4: memref<128x128xf32, #tpu.memory_space<vmem>>, %arg5: memref<1x128xf32, #tpu.memory_space<vmem>>, %arg6: memref<16x128xf32, #tpu.memory_space<vmem>>, %arg7: memref<16x128xf32, #tpu.memory_space<vmem>>) attributes {dimension_semantics = [#tpu.dimension_semantics<parallel>, #tpu.dimension_semantics<arbitrary>], iteration_bounds = array<i64: 1, 1>, scalar_prefetch = 0 : i64, scratch_operands = 1 : i64, tpu.core_type = #tpu.core_type<tc>, window_params = [{transform_indices = @transform_0, window_bounds = array<i64: 16, 128>}, {pipeline_mode = #tpu.pipeline_mode<synchronous>, transform_indices = @transform_1, window_bounds = array<i64: 4, 128>}, {transform_indices = @transform_2, window_bounds = array<i64: 128, 128>}, {transform_indices = @transform_3, window_bounds = array<i64: 1, 128>}, {transform_indices = @transform_4, window_bounds = array<i64: 16, 128>}]} {
    %c0_i32 = arith.constant 0 : i32
    %0 = arith.cmpi eq, %arg1, %c0_i32 : i32
    %1 = arith.extui %0 : i1 to i32
    %c0_i32_0 = arith.constant 0 : i32
    %2 = arith.cmpi ne, %1, %c0_i32_0 : i32
    scf.if %2 {
      %c0_8 = arith.constant 0 : index
      %c0_9 = arith.constant 0 : index
      %10 = vector.load %arg2[%c0_8, %c0_9] : memref<16x128xf32, #tpu.memory_space<vmem>>, vector<16x128xf32>
      %c0_10 = arith.constant 0 : index
      %c0_11 = arith.constant 0 : index
      %11 = vector.load %arg3[%c0_10, %c0_11] : memref<4x128xf32, #tpu.memory_space<vmem>>, vector<4x128xf32>
      %12 = vector.extract_strided_slice %11 {offsets = [3, 0], sizes = [1, 128], strides = [1, 1]} : vector<4x128xf32> to vector<1x128xf32>
      %13 = vector.shape_cast %12 : vector<1x128xf32> to vector<1x128xf32>
      %14 = vector.broadcast %13 : vector<1x128xf32> to vector<16x128xf32>
      %15 = arith.mulf %14, %10 : vector<16x128xf32>
      %16 = vector.extract_strided_slice %11 {offsets = [2, 0], sizes = [1, 128], strides = [1, 1]} : vector<4x128xf32> to vector<1x128xf32>
      %17 = vector.broadcast %16 : vector<1x128xf32> to vector<16x128xf32>
      %18 = arith.addf %15, %17 : vector<16x128xf32>
      %19 = arith.mulf %18, %10 : vector<16x128xf32>
      %20 = vector.extract_strided_slice %11 {offsets = [1, 0], sizes = [1, 128], strides = [1, 1]} : vector<4x128xf32> to vector<1x128xf32>
      %21 = vector.broadcast %20 : vector<1x128xf32> to vector<16x128xf32>
      %22 = arith.addf %19, %21 : vector<16x128xf32>
      %23 = arith.mulf %22, %10 : vector<16x128xf32>
      %24 = vector.extract_strided_slice %11 {offsets = [0, 0], sizes = [1, 128], strides = [1, 1]} : vector<4x128xf32> to vector<1x128xf32>
      %25 = vector.broadcast %24 : vector<1x128xf32> to vector<16x128xf32>
      %26 = arith.addf %23, %25 : vector<16x128xf32>
      %c0_12 = arith.constant 0 : index
      %c0_13 = arith.constant 0 : index
      %27 = vector.load %arg7[%c0_12, %c0_13] : memref<16x128xf32, #tpu.memory_space<vmem>>, vector<16x128xf32>
      tpu.vector_store %arg7[%c0_12, %c0_13], %26 {strides = array<i32>} : memref<16x128xf32, #tpu.memory_space<vmem>>, vector<16x128xf32>,
    } else {
    }
    %c0 = arith.constant 0 : index
    %c0_1 = arith.constant 0 : index
    %3 = vector.load %arg7[%c0, %c0_1] : memref<16x128xf32, #tpu.memory_space<vmem>>, vector<16x128xf32>
    %c0_2 = arith.constant 0 : index
    %c0_3 = arith.constant 0 : index
    %4 = vector.load %arg4[%c0_2, %c0_3] : memref<128x128xf32, #tpu.memory_space<vmem>>, vector<128x128xf32>
    %cst = arith.constant dense<0.000000e+00> : vector<16x128xf32>
    %5 = tpu.matmul %3, %4, %cst {dimension_numbers = #tpu.dot_dimension_numbers<[1], [0], [0], [1], [0, 0, 1, 1], [], []>} : vector<16x128xf32>, vector<128x128xf32>, vector<16x128xf32> -> vector<16x128xf32>
    %c0_4 = arith.constant 0 : index
    %c0_5 = arith.constant 0 : index
    %6 = vector.load %arg5[%c0_4, %c0_5] : memref<1x128xf32, #tpu.memory_space<vmem>>, vector<1x128xf32>
    %7 = vector.broadcast %6 : vector<1x128xf32> to vector<16x128xf32>
    %8 = arith.addf %5, %7 : vector<16x128xf32>
    %c0_6 = arith.constant 0 : index
    %c0_7 = arith.constant 0 : index
    %9 = vector.load %arg6[%c0_6, %c0_7] : memref<16x128xf32, #tpu.memory_space<vmem>>, vector<16x128xf32>
    tpu.vector_store %arg6[%c0_6, %c0_7], %8 {strides = array<i32>} : memref<16x128xf32, #tpu.memory_space<vmem>>, vector<16x128xf32>,
    return
  }
  func.func @transform_0(%arg0: i32, %arg1: i32) -> (i32, i32) {
    %c0_i32 = arith.constant 0 : i32
    %c0_i32_0 = arith.constant 0 : i32
    return %arg0, %c0_i32 : i32, i32
  }
  func.func @transform_1(%arg0: i32, %arg1: i32) -> (i32, i32) {
    %c0_i32 = arith.constant 0 : i32
    %c0_i32_0 = arith.constant 0 : i32
    %c0_i32_1 = arith.constant 0 : i32
    return %c0_i32, %c0_i32_0 : i32, i32
  }
  func.func @transform_2(%arg0: i32, %arg1: i32) -> (i32, i32) {
    %c0_i32 = arith.constant 0 : i32
    %c0_i32_0 = arith.constant 0 : i32
    return %c0_i32, %arg1 : i32, i32
  }
  func.func @transform_3(%arg0: i32, %arg1: i32) -> (i32, i32) {
    %c0_i32 = arith.constant 0 : i32
    %c0_i32_0 = arith.constant 0 : i32
    return %c0_i32, %arg1 : i32, i32
  }
  func.func @transform_4(%arg0: i32, %arg1: i32) -> (i32, i32) {
    %c0_i32 = arith.constant 0 : i32
    return %arg0, %arg1 : i32, i32
  }
}

</mosaic_0001>

<llo_original>
// kernel: tpu_custom_call.1
$region0: #{tpu_custom_call.1}
  #allocation0 [shape = 'u32[]', space=smem, size = 0x4, offset = 0x4, fixed_abs, tag = 'smem constant byte address 0x4 - core index']
  #allocation1 [shape = 'u32[144,128]{1,0:T(1,128)}', space=vmem, size = 0x12000, scoped, tag = 'internal scratch']
  #allocation2 [shape = 'f32[16,128]{1,0:T(8,128)}', space=vmem, size = 0x2000, scoped, tag = 'scratch operand']
  %s0 = inlined_call_operand.hbm [shape: f32[16,128], index: 0, kind: input, shape index: {}]
  %s1 = inlined_call_operand.hbm [shape: f32[4,128], index: 1, kind: input, shape index: {}]
  %s2 = inlined_call_operand.hbm [shape: f32[128,128], index: 2, kind: input, shape index: {}]
  %s3 = inlined_call_operand.vmem [shape: f32[1,128], index: 3, kind: input, shape index: {}]
  %s4 = inlined_call_operand.hbm [shape: f32[16,128], index: 4, kind: output, shape index: {}]
  %s5 = sld [smem:[#allocation0]]
  $region42: #{tpu_custom_call.1} parent=0
    _
  %s7 = ssub.s32 1, %s5
  %s8 = scalar_select 0, %s7, %s5
  $region1: #{tpu_custom_call.1} parent=0
    #allocation3 [shape = 'u8[8192]{0}', space=vmem, size = 0x2000, scoped, tag = 'input window, operand 0, single buffered']
    #allocation4 [shape = 's32[1]{0}', space=sflag, size = 0x4, scoped, tag = 'scoped memory for tpu_custom_call.1']
    #allocation5 [shape = 's32[1]{0}', space=sflag, size = 0x4, scoped, tag = 'scoped memory for tpu_custom_call.1']
    #allocation6 [shape = 'u8[2048]{0}', space=vmem, size = 0x800, scoped, tag = 'input window, operand 1, single buffered']
    #allocation7 [shape = 's32[1]{0}', space=sflag, size = 0x4, scoped, tag = 'scoped memory for tpu_custom_call.1']
    #allocation8 [shape = 'u8[65536]{0}', space=vmem, size = 0x10000, scoped, tag = 'input window, operand 2, single buffered']
    #allocation9 [shape = 'u8[8192]{0}', space=vmem, size = 0x2000, scoped, tag = 'output window, operand 0, single buffered']
    %9 = vsyncpa [#allocation4], 0
    %10 = vsyncpa [#allocation7], 0
    %11 = vsyncpa [#allocation5], 0
    // Predicated region
    $region2: #{tpu_custom_call.1} parent=1 // pred_check
      _
    $region3: #{tpu_custom_call.1} parent=1 // pred_check_branch
      %13 = sbr.rel (0) target = $region5
    $region4: #{tpu_custom_call.1} parent=1 // pred_region
      %s15 = ssub.s32 256, 256
      %16 = vsyncadd [#allocation4], %s15
      %s17 = sshll.u32 [#allocation3], 4
      %s18 = int_to_ptr.vmem [resolvable:$true] %s17
      %23 = dma.hbm_to_vmem [thread:$0]  %s0, 256, %s18, [#allocation4], 128, 128, 8
    $region5: #{tpu_custom_call.1} parent=1 // pred_fallthru
      _
    // Predicated region
    $region6: #{tpu_custom_call.1} parent=1 // pred_check
      _
    $region7: #{tpu_custom_call.1} parent=1 // pred_check_branch
      %25 = sbr.rel (0) target = $region9
    $region8: #{tpu_custom_call.1} parent=1 // pred_region
      %s27 = ssub.s32 64, 64
      %28 = vsyncadd [#allocation7], %s27
      %s30 = sshll.u32 [#allocation6], 4
      %s31 = int_to_ptr.vmem [resolvable:$true] %s30
      %33 = dma.hbm_to_vmem [thread:$0]  %s1, 64, %s31, [#allocation7]
    $region9: #{tpu_custom_call.1} parent=1 // pred_fallthru
      _
    // Predicated region
    $region10: #{tpu_custom_call.1} parent=1 // pred_check
      _
    $region11: #{tpu_custom_call.1} parent=1 // pred_check_branch
      %35 = sbr.rel (0) target = $region13
    $region12: #{tpu_custom_call.1} parent=1 // pred_region
      %s37 = ssub.s32 2048, 2048
      %38 = vsyncadd [#allocation7], %s37
      %s39 = sshll.u32 [#allocation8], 4
      %s40 = int_to_ptr.vmem [resolvable:$true] %s39
      %45 = dma.hbm_to_vmem [thread:$0]  %s2, 2048, %s40, [#allocation7], 128, 128, 8
    $region13: #{tpu_custom_call.1} parent=1 // pred_fallthru
      _
    // Predicated region
    $region14: #{tpu_custom_call.1} parent=1 // pred_check
      _
    $region15: #{tpu_custom_call.1} parent=1 // pred_check_branch
      %47 = sbr.rel (0) target = $region17
    $region16: #{tpu_custom_call.1} parent=1 // pred_region
      _
    $region17: #{tpu_custom_call.1} parent=1 // pred_fallthru
      _
    // Predicated region
    $region18: #{tpu_custom_call.1} parent=1 // pred_check
      _
    $region19: #{tpu_custom_call.1} parent=1 // pred_check_branch
      %49 = sbr.rel (0) target = $region21
    $region20: #{tpu_custom_call.1} parent=1 // pred_region
      %50 = dma.done [#allocation4], 256
    $region21: #{tpu_custom_call.1} parent=1 // pred_fallthru
      _
    // Predicated region
    $region22: #{tpu_custom_call.1} parent=1 // pred_check
      _
    $region23: #{tpu_custom_call.1} parent=1 // pred_check_branch
      %52 = sbr.rel (0) target = $region25
    $region24: #{tpu_custom_call.1} parent=1 // pred_region
      %53 = dma.done [#allocation7], 64
    $region25: #{tpu_custom_call.1} parent=1 // pred_fallthru
      _
    // Predicated region
    $region26: #{tpu_custom_call.1} parent=1 // pred_check
      _
    $region27: #{tpu_custom_call.1} parent=1 // pred_check_branch
      %55 = sbr.rel (0) target = $region29
    $region28: #{tpu_custom_call.1} parent=1 // pred_region
      %56 = dma.done [#allocation7], 2048
    $region29: #{tpu_custom_call.1} parent=1 // pred_fallthru
      _
    %p57 = scmp.eq.s32.totalorder 0, 0
    // Predicated region
    $region30: #{tpu_custom_call.1} parent=1 // pred_check
      %p58 = pneg %p57
    $region31: #{tpu_custom_call.1} parent=1 // pred_check_branch
      %60 = sbr.rel (%p58) target = $region33
    $region32: #{tpu_custom_call.1} parent=1 // pred_region
      %v61 = vld [vmem:[#allocation3] sm:$0xff]
      %v62 = vld [vmem:[#allocation3 + $0x8] sm:$0xff]
      %v63 = vld [vmem:[#allocation6] sm:$0xf]
      %v64 = vlaneseq
      %v65 = vshrl.u32 %v64, 7
      %v66 = vsub.s32 3, %v65
      %v67 = vrot.slane %v63, %v66
      %v68 = vmul.f32 %v67, %v61
      %v69 = vmul.f32 %v67, %v62
      %v70 = vlaneseq
      %v71 = vshrl.u32 %v70, 7
      %v72 = vsub.s32 2, %v71
      %v73 = vrot.slane %v63, %v72
      %v74 = vadd.f32 %v68, %v73
      %v75 = vadd.f32 %v69, %v73
      %v76 = vmul.f32 %v74, %v61
      %v77 = vmul.f32 %v75, %v62
      %v78 = vlaneseq
      %v79 = vshrl.u32 %v78, 7
      %v80 = vsub.s32 1, %v79
      %v81 = vrot.slane %v63, %v80
      %v82 = vadd.f32 %v76, %v81
      %v83 = vadd.f32 %v77, %v81
      %v84 = vmul.f32 %v82, %v61
      %v85 = vmul.f32 %v83, %v62
      %v86 = vlaneseq
      %v87 = vshrl.u32 %v86, 7
      %v88 = vsub.s32 0, %v87
      %v89 = vrot.slane %v63, %v88
      %v90 = vadd.f32 %v84, %v89
      %v91 = vadd.f32 %v85, %v89
      %92 = vst [vmem:[#allocation2] sm:$0xff] %v90
      %93 = vst [vmem:[#allocation2 + $0x8] sm:$0xff] %v91
    $region33: #{tpu_custom_call.1} parent=1 // pred_fallthru
      _
    %v94 = vld [vmem:[#allocation2] sm:$0xff]
    %v95 = vld [vmem:[#allocation2 + $0x8] sm:$0xff]
    %v96 = vld [vmem:[#allocation8] sm:$0xff]
    %v97 = vld [vmem:[#allocation8 + $0x8] sm:$0xff]
    %v98 = vld [vmem:[#allocation8 + $0x10] sm:$0xff]
    %v99 = vld [vmem:[#allocation8 + $0x18] sm:$0xff]
    %v100 = vld [vmem:[#allocation8 + $0x20] sm:$0xff]
    %v101 = vld [vmem:[#allocation8 + $0x28] sm:$0xff]
    %v102 = vld [vmem:[#allocation8 + $0x30] sm:$0xff]
    %v103 = vld [vmem:[#allocation8 + $0x38] sm:$0xff]
    %v104 = vld [vmem:[#allocation8 + $0x40] sm:$0xff]
    %v105 = vld [vmem:[#allocation8 + $0x48] sm:$0xff]
    %v106 = vld [vmem:[#allocation8 + $0x50] sm:$0xff]
    %v107 = vld [vmem:[#allocation8 + $0x58] sm:$0xff]
    %v108 = vld [vmem:[#allocation8 + $0x60] sm:$0xff]
    %v109 = vld [vmem:[#allocation8 + $0x68] sm:$0xff]
    %v110 = vld [vmem:[#allocation8 + $0x70] sm:$0xff]
    %v111 = vld [vmem:[#allocation8 + $0x78] sm:$0xff]
    %v112 = vld [vmem:[%s3] sm:$0x1]
    %v114 = vlaneseq
    %v115 = vshrl.u32 %v114, 7
    %v116 = vsub.s32 0, %v115
    %v117 = vrot.slane %v112, %v116
    %119 = vmatprep.subr.mxu0 0.0
    %120 = vmatpush1.msra.mxu0 %v96
    %121 = vmatprep.subr.mxu0 0.0
    %122 = vmatpush1.msra.mxu0 %v97
    %123 = vmatprep.subr.mxu0 0.0
    %124 = vmatpush1.msra.mxu0 %v98
    %125 = vmatprep.subr.mxu0 0.0
    %126 = vmatpush1.msra.mxu0 %v99
    %127 = vmatprep.subr.mxu0 0.0
    %128 = vmatpush1.msra.mxu0 %v100
    %129 = vmatprep.subr.mxu0 0.0
    %130 = vmatpush1.msra.mxu0 %v101
    %131 = vmatprep.subr.mxu0 0.0
    %132 = vmatpush1.msra.mxu0 %v102
    %133 = vmatprep.subr.mxu0 0.0
    %134 = vmatpush1.msra.mxu0 %v103
    %135 = vmatprep.subr.mxu0 0.0
    %136 = vmatpush1.msra.mxu0 %v104
    %137 = vmatprep.subr.mxu0 0.0
    %138 = vmatpush1.msra.mxu0 %v105
    %139 = vmatprep.subr.mxu0 0.0
    %140 = vmatpush1.msra.mxu0 %v106
    %141 = vmatprep.subr.mxu0 0.0
    %142 = vmatpush1.msra.mxu0 %v107
    %143 = vmatprep.subr.mxu0 0.0
    %144 = vmatpush1.msra.mxu0 %v108
    %145 = vmatprep.subr.mxu0 0.0
    %146 = vmatpush1.msra.mxu0 %v109
    %147 = vmatprep.subr.mxu0 0.0
    %148 = vmatpush1.msra.mxu0 %v110
    %149 = vmatprep.subr.mxu0 0.0
    %150 = vmatpush1.msra.mxu0 %v111
    %151 = vmatprep.subr.mxu0 0.0
    %152 = vmatpush1.msra.mxu0 0.0
    %153 = vmatprep.subr.mxu0 0.0
    %154 = vmatpush1.msra.mxu0 0.0
    %155 = vmatprep.subr.mxu0 0.0
    %156 = vmatpush1.msra.mxu0 0.0
    %157 = vmatprep.subr.mxu0 0.0
    %158 = vmatpush1.msra.mxu0 0.0
    %159 = vmatprep.subr.mxu0 0.0
    %160 = vmatpush1.msra.mxu0 0.0
    %161 = vmatprep.subr.mxu0 0.0
    %162 = vmatpush1.msra.mxu0 0.0
    %163 = vmatprep.subr.mxu0 0.0
    %164 = vmatpush1.msra.mxu0 0.0
    %165 = vmatprep.subr.mxu0 0.0
    %166 = vmatpush1.msra.mxu0 0.0
    %167 = vmatprep.subr.mxu0 0.0
    %168 = vmatpush1.msra.mxu0 0.0
    %169 = vmatprep.subr.mxu0 0.0
    %170 = vmatpush1.msra.mxu0 0.0
    %171 = vmatprep.subr.mxu0 0.0
    %172 = vmatpush1.msra.mxu0 0.0
    %173 = vmatprep.subr.mxu0 0.0
    %174 = vmatpush1.msra.mxu0 0.0
    %175 = vmatprep.subr.mxu0 0.0
    %176 = vmatpush1.msra.mxu0 0.0
    %177 = vmatprep.subr.mxu0 0.0
    %178 = vmatpush1.msra.mxu0 0.0
    %179 = vmatprep.subr.mxu0 0.0
    %180 = vmatpush1.msra.mxu0 0.0
    %181 = vmatprep.subr.mxu0 0.0
    %182 = vmatpush1.msra.mxu0 0.0
    %183 = vmatprep.mubr.f32.mxu0 0.0
    %184 = vmatmul.mubr.f32.gmra.mrb[0].mxu0 %v94
    %v185 = vpop.f32.mrb[0].mxu0
    %v186 = vadd.f32 %v117, %v185
    %v187 = vpop.f32.mrb[0].mxu0
    %188 = vmatprep.mubr.f32.mxu0 0.0
    %189 = vmatmul.mubr.f32.gmra.mrb[0].mxu0 %v95
    %v190 = vpop.f32.mrb[0].mxu0
    %v191 = vadd.f32 %v117, %v190
    %v192 = vpop.f32.mrb[0].mxu0
    %193 = vdwg.mxu0
    %194 = vst [vmem:[#allocation9] sm:$0xff] %v186
    %195 = vst [vmem:[#allocation9 + $0x8] sm:$0xff] %v191
    // Predicated region
    $region34: #{tpu_custom_call.1} parent=1 // pred_check
      _
    $region35: #{tpu_custom_call.1} parent=1 // pred_check_branch
      %197 = sbr.rel (0) target = $region37
    $region36: #{tpu_custom_call.1} parent=1 // pred_region
      %s199 = ssub.s32 256, 256
      %200 = vsyncadd [#allocation5], %s199
      %s201 = sshll.u32 [#allocation9], 4
      %s202 = int_to_ptr.vmem [resolvable:$true] %s201
      %207 = dma.vmem_to_hbm [thread:$0]  %s202, 256, %s4, [#allocation5], 128, 128, 8
    $region37: #{tpu_custom_call.1} parent=1 // pred_fallthru
      _
    // Predicated region
    $region38: #{tpu_custom_call.1} parent=1 // pred_check
      _
    $region39: #{tpu_custom_call.1} parent=1 // pred_check_branch
      %209 = sbr.rel (0) target = $region41
    $region40: #{tpu_custom_call.1} parent=1 // pred_region
      %210 = dma.done [#allocation5], 256
    $region41: #{tpu_custom_call.1} parent=1 // pred_fallthru
      _
    %211 = vsyncpa [#allocation4], 1
    %212 = vsyncpa [#allocation7], 1
    %213 = vsyncpa [#allocation5], 1

</llo_original>
